<compile_context>
chip_gen: v6e
topology: v6e:2x2x1
jax: 0.10.0
libtpu: 0.0.40
codegen_flags: <defaults>
</compile_context>

<pallas_src>
import functools

import jax
import jax.numpy as jnp
from jax import lax
from jax.experimental import pallas as pl
from jax.experimental.pallas import tpu as pltpu


# ----------------------- direct 3-D convolution kernel ----------------------

def _conv_kernel(x_ref, w_ref, o_ref, acc_ref, *, kh, kw, Wp, Q, cin):
    """One grid step = one (batch, out-depth, depth-tap dz) triple.

    x_ref : (1, 1, Cin, P)        padded input plane, flat (h, w) on lanes, bf16
    w_ref : (1, kh*kw, Cout, Cin) depth-tap dz of the filter, bf16
    o_ref : (1, 1, Cout, Q)       output plane, flat (h, w_padded) on lanes, f32
    acc   : (Cout, Q)             f32 accumulator, resident across the dz axis

    Flat-shift trick: output position q = h*Wp + w (padded width Wp), so the
    tap (dy, dx) reads q + dy*Wp + dx == (h+dy, w+dx).  The few lanes that wrap
    across a row land in padding columns w in [Wo, Wp) which the wrapper
    discards, so they never pollute valid outputs.
    """
    dz = pl.program_id(2)

    @pl.when(dz == 0)
    def _init():
        acc_ref[...] = jnp.zeros_like(acc_ref)

    contrib = None
    for dy in range(kh):
        for dx in range(kw):
            s = dy * Wp + dx                           # static in-plane shift
            xw = x_ref[0, 0, :, pl.ds(s, Q)]           # (Cin, Q) bf16
            wo = w_ref[0, dy * kw + dx]                # (Cout, Cin) bf16
            if cin == 1:                               # rank-1 update -> VPU
                term = wo.astype(jnp.float32) * xw.astype(jnp.float32)
            else:                                      # MXU, f32 accumulate
                term = jnp.dot(wo, xw, preferred_element_type=jnp.float32)
            contrib = term if contrib is None else contrib + term
    acc_ref[...] += contrib

    @pl.when(dz == pl.num_programs(2) - 1)
    def _finish():
        o_ref[...] = acc_ref[...].reshape(o_ref.shape)


def conv3d(x, w, *, padding):
    """Stride-1 3-D conv.  x: (B, D, C, H, W) f32, w: (kd, kh, kw, Cin, Cout).
    Returns (B, Do, Cout, Ho, Wo) f32."""
    kd, kh, kw, cin, cout = w.shape
    B, D, C, H, W = x.shape
    assert C == cin

    if padding == "SAME":
        pd, ph, pw = kd // 2, kh // 2, kw // 2
    else:  # VALID
        pd = ph = pw = 0
    extra = 1 if kw > 1 else 0            # one zero row of flat-shift slack
    xp = jnp.pad(x, ((0, 0), (pd, pd), (0, 0), (ph, ph + extra), (pw, pw)))

    Dp = D + 2 * pd
    Hp_a = H + 2 * ph + extra
    Wp = W + 2 * pw
    Do = D + 2 * pd - kd + 1
    Ho = H + 2 * ph - kh + 1
    Wo = W + 2 * pw - kw + 1
    P = Hp_a * Wp                          # flattened padded plane
    Q = Ho * Wp                            # flattened output plane (padded W)
    assert (kh - 1) * Wp + (kw - 1) + Q <= P

    # Lane-dense, channels-first planes; reshape of the trailing dims is free.
    xf = xp.reshape(B, Dp, cin, P).astype(jnp.bfloat16)
    wt = jnp.transpose(w, (0, 1, 2, 4, 3)).reshape(kd, kh * kw, cout, cin)
    wt = wt.astype(jnp.bfloat16)

    kernel = functools.partial(_conv_kernel, kh=kh, kw=kw, Wp=Wp, Q=Q, cin=cin)
    flops = int(2 * B * Do * Q * cin * cout * kd * kh * kw)
    bytes_acc = int(B * Do * kd * cin * P * 2          # plane re-reads (kd x)
                    + kd * kh * kw * cin * cout * 2    # weights
                    + B * Do * cout * Q * 4)           # output write

    y = pl.pallas_call(
        kernel,
        out_shape=jax.ShapeDtypeStruct((B, Do, cout, Q), jnp.float32),
        grid_spec=pltpu.PrefetchScalarGridSpec(
            num_scalar_prefetch=0,
            grid=(B, Do, kd),                          # reduction (dz) last
            in_specs=[
                pl.BlockSpec((1, 1, cin, P), lambda b, do, dz: (b, do + dz, 0, 0)),
                pl.BlockSpec((1, kh * kw, cout, cin), lambda b, do, dz: (dz, 0, 0, 0)),
            ],
            out_specs=pl.BlockSpec((1, 1, cout, Q), lambda b, do, dz: (b, do, 0, 0)),
            scratch_shapes=[pltpu.VMEM((cout, Q), jnp.float32)],
        ),
        compiler_params=pltpu.CompilerParams(
            dimension_semantics=("parallel", "parallel", "arbitrary"),
            vmem_limit_bytes=48 * 1024 * 1024),
        cost_estimate=pl.CostEstimate(flops=flops, transcendentals=0,
                                      bytes_accessed=bytes_acc),
    )(xf, wt)

    # Drop the padded / garbage columns w in [Wo, Wp).
    y = y.reshape(B, Do, cout, Ho, Wp)[:, :, :, :, :Wo]
    return y


# ------------------------------ head kernel --------------------------------

def _head_kernel(x_ref, w1t_ref, b1_ref, w2_ref, b2_ref, o_ref, acc_ref):
    """Fused classifier: h = elu(x @ W1 + b1); p = softmax(h @ W2 + b2).
    Grid axis tiles the flattened feature dim K; w1 is streamed transposed
    (lane = K tile) so the weight DMA is lane-dense."""
    k = pl.program_id(0)

    @pl.when(k == 0)
    def _init():
        acc_ref[...] = jnp.zeros_like(acc_ref)

    acc_ref[...] += lax.dot_general(
        x_ref[...], w1t_ref[...],
        dimension_numbers=(((1,), (1,)), ((), ())),     # x @ w1t^T
        preferred_element_type=jnp.float32)

    @pl.when(k == pl.num_programs(0) - 1)
    def _finish():
        h = acc_ref[...] + b1_ref[...]
        h = jnp.where(h > 0, h, jnp.exp(h) - 1.0)       # ELU (alpha = 1)
        logits = jnp.dot(h, w2_ref[...],
                         preferred_element_type=jnp.float32) + b2_ref[...]
        m = jnp.max(logits, axis=-1, keepdims=True)
        e = jnp.exp(logits - m)
        o_ref[...] = e / jnp.sum(e, axis=-1, keepdims=True)   # softmax(dim=1)


def pallas_head(x_flat, w1, b1, w2, b2, *, tk=2048):
    B, F = x_flat.shape
    Hh = w1.shape[1]
    Cc = w2.shape[1]
    tk = min(tk, ((F + 127) // 128) * 128)              # lane-aligned K tile
    Fp = ((F + tk - 1) // tk) * tk

    w1t = jnp.transpose(w1)                             # (Hh, F), lane = K
    if Fp != F:                                         # zero-pad K (no-op)
        x_flat = jnp.pad(x_flat, ((0, 0), (0, Fp - F)))
        w1t = jnp.pad(w1t, ((0, 0), (0, Fp - F)))
    x_bf = x_flat.astype(jnp.bfloat16)
    w1t_bf = w1t.astype(jnp.bfloat16)

    flops = int(2 * B * Fp * Hh + 2 * B * Hh * Cc)
    bytes_acc = int(B * Fp * 2 + Hh * Fp * 2 + Hh * Cc * 4 + B * Cc * 4)

    return pl.pallas_call(
        _head_kernel,
        out_shape=jax.ShapeDtypeStruct((B, Cc), jnp.float32),
        grid_spec=pltpu.PrefetchScalarGridSpec(
            num_scalar_prefetch=0,
            grid=(Fp // tk,),
            in_specs=[
                pl.BlockSpec((B, tk), lambda k: (0, k)),
                pl.BlockSpec((Hh, tk), lambda k: (0, k)),
                pl.BlockSpec((1, Hh), lambda k: (0, 0)),
                pl.BlockSpec((Hh, Cc), lambda k: (0, 0)),
                pl.BlockSpec((1, Cc), lambda k: (0, 0)),
            ],
            out_specs=pl.BlockSpec((B, Cc), lambda k: (0, 0)),
            scratch_shapes=[pltpu.VMEM((B, Hh), jnp.float32)],
        ),
        compiler_params=pltpu.CompilerParams(
            dimension_semantics=("arbitrary",),
            vmem_limit_bytes=48 * 1024 * 1024),
        cost_estimate=pl.CostEstimate(flops=flops,
                                      transcendentals=int(B * Hh + B * Cc),
                                      bytes_accessed=bytes_acc),
    )(x_bf, w1t_bf,
      b1.reshape(1, Hh).astype(jnp.float32),
      w2.astype(jnp.float32),
      b2.reshape(1, Cc).astype(jnp.float32))


# --------------------- pool / bn / resnet glue (plain JAX) ------------------
# Activations between ops live as (B, D, C, H, W) so the conv kernel needs no
# per-layer transposes (only cheap pad / slice / reshape).

def maxpool3(x):
    B, D, C, H, W = x.shape
    assert D % 3 == 0 and H % 3 == 0 and W % 3 == 0, "MaxPooling(3,3) needs /3 dims"
    return x.reshape(B, D // 3, 3, C, H // 3, 3, W // 3, 3).max(axis=(2, 5, 7))


def bn_relu(x, eps=1e-4):
    # BatchNormReLU with gamma=1, beta=0 (batch statistics, as in rev 1).
    # TODO(synk): eval-mode running statistics of a trained scn.BatchNormReLU
    # are not reproducible without trained parameters.
    mean = jnp.mean(x, axis=(0, 1, 3, 4), keepdims=True)
    var = jnp.var(x, axis=(0, 1, 3, 4), keepdims=True)
    return jnp.maximum((x - mean) * lax.rsqrt(var + eps), 0.0)


def basic_block(x, params):
    # scn 'b' block: shortcut(x) + Conv(BNReLU(Conv(BNReLU(x))))
    w1, w2, wsc = params
    sc = x if wsc is None else conv3d(x, wsc, padding="VALID")   # NIN shortcut
    h = bn_relu(x)
    h = conv3d(h, w1, padding="SAME")
    h = bn_relu(h)
    h = conv3d(h, w2, padding="SAME")
    return sc + h


# ------------------------------- parameters --------------------------------

def init_params(key):
    def conv_w(k, shape):
        fan_in = shape[0] * shape[1] * shape[2] * shape[3]
        return jax.random.normal(k, shape, jnp.float32) / jnp.sqrt(fan_in)

    keys = iter(jax.random.split(key, 64))
    p = {}
    p["conv0"] = conv_w(next(keys), (3, 3, 3, 1, 4))          # SubmanifoldConv 1->4
    blocks = []
    cin = 4
    for cout in (8, 16, 24):                                  # SparseResNet groups
        for _rep in range(2):
            w1 = conv_w(next(keys), (3, 3, 3, cin, cout))
            w2 = conv_w(next(keys), (3, 3, 3, cout, cout))
            wsc = None if cin == cout else conv_w(next(keys), (1, 1, 1, cin, cout))
            blocks.append((w1, w2, wsc))
            cin = cout
    p["blocks"] = blocks
    p["conv_final"] = conv_w(next(keys), (5, 5, 5, 24, 32))   # Convolution 24->32, k5
    return p


# --------------------------------- forward ---------------------------------

def forward(x_ncdhw, params):
    # TODO(synk): scn.InputLayer(mode=3) sparse active-site tracking has no
    # dense equivalent; the conv stack is evaluated densely.
    x = jnp.transpose(x_ncdhw, (0, 2, 1, 3, 4))               # NCDHW -> (B,D,C,H,W)
    x = conv3d(x, params["conv0"], padding="SAME")            # SubmanifoldConvolution
    x = maxpool3(x)                                           # MaxPooling(3,3)
    for blk in params["blocks"]:                              # SparseResNet
        x = basic_block(x, blk)
    x = conv3d(x, params["conv_final"], padding="VALID")      # Convolution(24,32,5,1)
    x = bn_relu(x)                                            # BatchNormReLU(32)
    x = jnp.transpose(x, (0, 2, 1, 3, 4))                     # SparseToDense (NCDHW)
    B = x.shape[0]
    x_flat = x.reshape(B, -1)                                 # x.view(-1, 32*D*H*W)
    return pallas_head(x_flat, params["w_lin1"], params["b_lin1"],
                       params["w_lin2"], params["b_lin2"])    # Linear/ELU/Linear/softmax


# ----------------------------------- main -----------------------------------

if __name__ == "__main__":
    key = jax.random.PRNGKey(0)
    kx, km, kp, kl1, kb1, kl2, kb2 = jax.random.split(key, 7)

    # Small stand-in for the (150,150,300) voxel grid: (18,18,30)
    #   -> maxpool/3 -> (6,6,10) -> conv5 valid -> (2,2,6), 32 channels.
    B, D, H, W = 2, 18, 18, 30
    x = jax.random.uniform(kx, (B, 1, D, H, W), jnp.float32)
    mask = (jax.random.uniform(km, (B, 1, D, H, W)) < 0.1).astype(jnp.float32)
    x = x * mask                                              # mimic sparse hits

    params = init_params(kp)
    F = 32 * (D // 3 - 4) * (H // 3 - 4) * (W // 3 - 4)       # = 768 here
    params["w_lin1"] = jax.random.normal(kl1, (F, 32), jnp.float32) / jnp.sqrt(float(F))
    params["b_lin1"] = jax.random.normal(kb1, (32,), jnp.float32) * 0.01
    params["w_lin2"] = jax.random.normal(kl2, (32, 3), jnp.float32) / jnp.sqrt(32.0)
    params["b_lin2"] = jax.random.normal(kb2, (3,), jnp.float32) * 0.01

    out = jax.block_until_ready(forward(x, params))
    assert out.shape == (B, 3)
    assert bool(jnp.all(jnp.isfinite(out)))
    assert bool(jnp.allclose(jnp.sum(out, axis=1), 1.0, atol=1e-5))
    print("KERNEL_OK")
</pallas_src>

<mosaic_0001>
module attributes {stable_mosaic.version = 11 : i64} {
  func.func @_conv_kernel(%arg0: i32, %arg1: i32, %arg2: i32, %arg3: memref<1x1x1x672xbf16, #tpu.memory_space<vmem>>, %arg4: memref<1x9x4x1xbf16, #tpu.memory_space<vmem>>, %arg5: memref<1x1x4x576xf32, #tpu.memory_space<vmem>>, %arg6: memref<4x576xf32, #tpu.memory_space<vmem>>) attributes {dimension_semantics = [#tpu.dimension_semantics<parallel>, #tpu.dimension_semantics<parallel>, #tpu.dimension_semantics<arbitrary>], iteration_bounds = array<i64: 2, 18, 3>, scalar_prefetch = 0 : i64, scratch_operands = 1 : i64, tpu.core_type = #tpu.core_type<tc>, window_params = [{transform_indices = @transform_0, window_bounds = array<i64: 1, 1, 1, 672>}, {transform_indices = @transform_1, window_bounds = array<i64: 1, 9, 4, 1>}, {transform_indices = @transform_2, window_bounds = array<i64: 1, 1, 4, 576>}]} {
    %c0_i32 = arith.constant 0 : i32
    %0 = arith.cmpi eq, %arg2, %c0_i32 : i32
    %1 = arith.extui %0 : i1 to i32
    %c0_i32_0 = arith.constant 0 : i32
    %2 = arith.cmpi ne, %1, %c0_i32_0 : i32
    scf.if %2 {
      %cst = arith.constant 0.000000e+00 : f32
      %98 = vector.broadcast %cst : f32 to vector<4x576xf32>
      %c0_63 = arith.constant 0 : index
      %c0_64 = arith.constant 0 : index
      %99 = vector.load %arg6[%c0_63, %c0_64] : memref<4x576xf32, #tpu.memory_space<vmem>>, vector<4x576xf32>
      tpu.vector_store %arg6[%c0_63, %c0_64], %98 {strides = array<i32>} : memref<4x576xf32, #tpu.memory_space<vmem>>, vector<4x576xf32>,
    } else {
    }
    %c0 = arith.constant 0 : index
    %c0_1 = arith.constant 0 : index
    %c0_2 = arith.constant 0 : index
    %c0_3 = arith.constant 0 : index
    %3 = vector.load %arg3[%c0, %c0_1, %c0_2, %c0_3] : memref<1x1x1x672xbf16, #tpu.memory_space<vmem>>, vector<1x1x1x576xbf16>
    %4 = vector.shape_cast %3 : vector<1x1x1x576xbf16> to vector<1x576xbf16>
    %c0_4 = arith.constant 0 : index
    %c0_5 = arith.constant 0 : index
    %c0_6 = arith.constant 0 : index
    %c0_7 = arith.constant 0 : index
    %5 = vector.load %arg4[%c0_4, %c0_5, %c0_6, %c0_7] : memref<1x9x4x1xbf16, #tpu.memory_space<vmem>>, vector<1x1x4x1xbf16>
    %6 = vector.shape_cast %5 : vector<1x1x4x1xbf16> to vector<4x1xbf16>
    %7 = arith.extf %6 : vector<4x1xbf16> to vector<4x1xf32>
    %8 = arith.extf %4 : vector<1x576xbf16> to vector<1x576xf32>
    %9 = vector.broadcast %7 : vector<4x1xf32> to vector<4x576xf32>
    %10 = vector.broadcast %8 : vector<1x576xf32> to vector<4x576xf32>
    %11 = arith.mulf %9, %10 : vector<4x576xf32>
    %c0_8 = arith.constant 0 : index
    %c0_9 = arith.constant 0 : index
    %c0_10 = arith.constant 0 : index
    %c1 = arith.constant 1 : index
    %12 = vector.load %arg3[%c0_8, %c0_9, %c0_10, %c1] : memref<1x1x1x672xbf16, #tpu.memory_space<vmem>>, vector<1x1x1x576xbf16>
    %13 = vector.shape_cast %12 : vector<1x1x1x576xbf16> to vector<1x576xbf16>
    %c0_11 = arith.constant 0 : index
    %c1_12 = arith.constant 1 : index
    %c0_13 = arith.constant 0 : index
    %c0_14 = arith.constant 0 : index
    %14 = vector.load %arg4[%c0_11, %c1_12, %c0_13, %c0_14] : memref<1x9x4x1xbf16, #tpu.memory_space<vmem>>, vector<1x1x4x1xbf16>
    %15 = vector.shape_cast %14 : vector<1x1x4x1xbf16> to vector<4x1xbf16>
    %16 = arith.extf %15 : vector<4x1xbf16> to vector<4x1xf32>
    %17 = arith.extf %13 : vector<1x576xbf16> to vector<1x576xf32>
    %18 = vector.broadcast %16 : vector<4x1xf32> to vector<4x576xf32>
    %19 = vector.broadcast %17 : vector<1x576xf32> to vector<4x576xf32>
    %20 = arith.mulf %18, %19 : vector<4x576xf32>
    %21 = arith.addf %11, %20 : vector<4x576xf32>
    %c0_15 = arith.constant 0 : index
    %c0_16 = arith.constant 0 : index
    %c0_17 = arith.constant 0 : index
    %c2 = arith.constant 2 : index
    %22 = vector.load %arg3[%c0_15, %c0_16, %c0_17, %c2] : memref<1x1x1x672xbf16, #tpu.memory_space<vmem>>, vector<1x1x1x576xbf16>
    %23 = vector.shape_cast %22 : vector<1x1x1x576xbf16> to vector<1x576xbf16>
    %c0_18 = arith.constant 0 : index
    %c2_19 = arith.constant 2 : index
    %c0_20 = arith.constant 0 : index
    %c0_21 = arith.constant 0 : index
    %24 = vector.load %arg4[%c0_18, %c2_19, %c0_20, %c0_21] : memref<1x9x4x1xbf16, #tpu.memory_space<vmem>>, vector<1x1x4x1xbf16>
    %25 = vector.shape_cast %24 : vector<1x1x4x1xbf16> to vector<4x1xbf16>
    %26 = arith.extf %25 : vector<4x1xbf16> to vector<4x1xf32>
    %27 = arith.extf %23 : vector<1x576xbf16> to vector<1x576xf32>
    %28 = vector.broadcast %26 : vector<4x1xf32> to vector<4x576xf32>
    %29 = vector.broadcast %27 : vector<1x576xf32> to vector<4x576xf32>
    %30 = arith.mulf %28, %29 : vector<4x576xf32>
    %31 = arith.addf %21, %30 : vector<4x576xf32>
    %c0_22 = arith.constant 0 : index
    %c0_23 = arith.constant 0 : index
    %c0_24 = arith.constant 0 : index
    %c32 = arith.constant 32 : index
    %32 = vector.load %arg3[%c0_22, %c0_23, %c0_24, %c32] : memref<1x1x1x672xbf16, #tpu.memory_space<vmem>>, vector<1x1x1x576xbf16>
    %33 = vector.shape_cast %32 : vector<1x1x1x576xbf16> to vector<1x576xbf16>
    %c0_25 = arith.constant 0 : index
    %c3 = arith.constant 3 : index
    %c0_26 = arith.constant 0 : index
    %c0_27 = arith.constant 0 : index
    %34 = vector.load %arg4[%c0_25, %c3, %c0_26, %c0_27] : memref<1x9x4x1xbf16, #tpu.memory_space<vmem>>, vector<1x1x4x1xbf16>
    %35 = vector.shape_cast %34 : vector<1x1x4x1xbf16> to vector<4x1xbf16>
    %36 = arith.extf %35 : vector<4x1xbf16> to vector<4x1xf32>
    %37 = arith.extf %33 : vector<1x576xbf16> to vector<1x576xf32>
    %38 = vector.broadcast %36 : vector<4x1xf32> to vector<4x576xf32>
    %39 = vector.broadcast %37 : vector<1x576xf32> to vector<4x576xf32>
    %40 = arith.mulf %38, %39 : vector<4x576xf32>
    %41 = arith.addf %31, %40 : vector<4x576xf32>
    %c0_28 = arith.constant 0 : index
    %c0_29 = arith.constant 0 : index
    %c0_30 = arith.constant 0 : index
    %c33 = arith.constant 33 : index
    %42 = vector.load %arg3[%c0_28, %c0_29, %c0_30, %c33] : memref<1x1x1x672xbf16, #tpu.memory_space<vmem>>, vector<1x1x1x576xbf16>
    %43 = vector.shape_cast %42 : vector<1x1x1x576xbf16> to vector<1x576xbf16>
    %c0_31 = arith.constant 0 : index
    %c4 = arith.constant 4 : index
    %c0_32 = arith.constant 0 : index
    %c0_33 = arith.constant 0 : index
    %44 = vector.load %arg4[%c0_31, %c4, %c0_32, %c0_33] : memref<1x9x4x1xbf16, #tpu.memory_space<vmem>>, vector<1x1x4x1xbf16>
    %45 = vector.shape_cast %44 : vector<1x1x4x1xbf16> to vector<4x1xbf16>
    %46 = arith.extf %45 : vector<4x1xbf16> to vector<4x1xf32>
    %47 = arith.extf %43 : vector<1x576xbf16> to vector<1x576xf32>
    %48 = vector.broadcast %46 : vector<4x1xf32> to vector<4x576xf32>
    %49 = vector.broadcast %47 : vector<1x576xf32> to vector<4x576xf32>
    %50 = arith.mulf %48, %49 : vector<4x576xf32>
    %51 = arith.addf %41, %50 : vector<4x576xf32>
    %c0_34 = arith.constant 0 : index
    %c0_35 = arith.constant 0 : index
    %c0_36 = arith.constant 0 : index
    %c34 = arith.constant 34 : index
    %52 = vector.load %arg3[%c0_34, %c0_35, %c0_36, %c34] : memref<1x1x1x672xbf16, #tpu.memory_space<vmem>>, vector<1x1x1x576xbf16>
    %53 = vector.shape_cast %52 : vector<1x1x1x576xbf16> to vector<1x576xbf16>
    %c0_37 = arith.constant 0 : index
    %c5 = arith.constant 5 : index
    %c0_38 = arith.constant 0 : index
    %c0_39 = arith.constant 0 : index
    %54 = vector.load %arg4[%c0_37, %c5, %c0_38, %c0_39] : memref<1x9x4x1xbf16, #tpu.memory_space<vmem>>, vector<1x1x4x1xbf16>
    %55 = vector.shape_cast %54 : vector<1x1x4x1xbf16> to vector<4x1xbf16>
    %56 = arith.extf %55 : vector<4x1xbf16> to vector<4x1xf32>
    %57 = arith.extf %53 : vector<1x576xbf16> to vector<1x576xf32>
    %58 = vector.broadcast %56 : vector<4x1xf32> to vector<4x576xf32>
    %59 = vector.broadcast %57 : vector<1x576xf32> to vector<4x576xf32>
    %60 = arith.mulf %58, %59 : vector<4x576xf32>
    %61 = arith.addf %51, %60 : vector<4x576xf32>
    %c0_40 = arith.constant 0 : index
    %c0_41 = arith.constant 0 : index
    %c0_42 = arith.constant 0 : index
    %c64 = arith.constant 64 : index
    %62 = vector.load %arg3[%c0_40, %c0_41, %c0_42, %c64] : memref<1x1x1x672xbf16, #tpu.memory_space<vmem>>, vector<1x1x1x576xbf16>
    %63 = vector.shape_cast %62 : vector<1x1x1x576xbf16> to vector<1x576xbf16>
    %c0_43 = arith.constant 0 : index
    %c6 = arith.constant 6 : index
    %c0_44 = arith.constant 0 : index
    %c0_45 = arith.constant 0 : index
    %64 = vector.load %arg4[%c0_43, %c6, %c0_44, %c0_45] : memref<1x9x4x1xbf16, #tpu.memory_space<vmem>>, vector<1x1x4x1xbf16>
    %65 = vector.shape_cast %64 : vector<1x1x4x1xbf16> to vector<4x1xbf16>
    %66 = arith.extf %65 : vector<4x1xbf16> to vector<4x1xf32>
    %67 = arith.extf %63 : vector<1x576xbf16> to vector<1x576xf32>
    %68 = vector.broadcast %66 : vector<4x1xf32> to vector<4x576xf32>
    %69 = vector.broadcast %67 : vector<1x576xf32> to vector<4x576xf32>
    %70 = arith.mulf %68, %69 : vector<4x576xf32>
    %71 = arith.addf %61, %70 : vector<4x576xf32>
    %c0_46 = arith.constant 0 : index
    %c0_47 = arith.constant 0 : index
    %c0_48 = arith.constant 0 : index
    %c65 = arith.constant 65 : index
    %72 = vector.load %arg3[%c0_46, %c0_47, %c0_48, %c65] : memref<1x1x1x672xbf16, #tpu.memory_space<vmem>>, vector<1x1x1x576xbf16>
    %73 = vector.shape_cast %72 : vector<1x1x1x576xbf16> to vector<1x576xbf16>
    %c0_49 = arith.constant 0 : index
    %c7 = arith.constant 7 : index
    %c0_50 = arith.constant 0 : index
    %c0_51 = arith.constant 0 : index
    %74 = vector.load %arg4[%c0_49, %c7, %c0_50, %c0_51] : memref<1x9x4x1xbf16, #tpu.memory_space<vmem>>, vector<1x1x4x1xbf16>
    %75 = vector.shape_cast %74 : vector<1x1x4x1xbf16> to vector<4x1xbf16>
    %76 = arith.extf %75 : vector<4x1xbf16> to vector<4x1xf32>
    %77 = arith.extf %73 : vector<1x576xbf16> to vector<1x576xf32>
    %78 = vector.broadcast %76 : vector<4x1xf32> to vector<4x576xf32>
    %79 = vector.broadcast %77 : vector<1x576xf32> to vector<4x576xf32>
    %80 = arith.mulf %78, %79 : vector<4x576xf32>
    %81 = arith.addf %71, %80 : vector<4x576xf32>
    %c0_52 = arith.constant 0 : index
    %c0_53 = arith.constant 0 : index
    %c0_54 = arith.constant 0 : index
    %c66 = arith.constant 66 : index
    %82 = vector.load %arg3[%c0_52, %c0_53, %c0_54, %c66] : memref<1x1x1x672xbf16, #tpu.memory_space<vmem>>, vector<1x1x1x576xbf16>
    %83 = vector.shape_cast %82 : vector<1x1x1x576xbf16> to vector<1x576xbf16>
    %c0_55 = arith.constant 0 : index
    %c8 = arith.constant 8 : index
    %c0_56 = arith.constant 0 : index
    %c0_57 = arith.constant 0 : index
    %84 = vector.load %arg4[%c0_55, %c8, %c0_56, %c0_57] : memref<1x9x4x1xbf16, #tpu.memory_space<vmem>>, vector<1x1x4x1xbf16>
    %85 = vector.shape_cast %84 : vector<1x1x4x1xbf16> to vector<4x1xbf16>
    %86 = arith.extf %85 : vector<4x1xbf16> to vector<4x1xf32>
    %87 = arith.extf %83 : vector<1x576xbf16> to vector<1x576xf32>
    %88 = vector.broadcast %86 : vector<4x1xf32> to vector<4x576xf32>
    %89 = vector.broadcast %87 : vector<1x576xf32> to vector<4x576xf32>
    %90 = arith.mulf %88, %89 : vector<4x576xf32>
    %91 = arith.addf %81, %90 : vector<4x576xf32>
    %c0_58 = arith.constant 0 : index
    %c0_59 = arith.constant 0 : index
    %92 = vector.load %arg6[%c0_58, %c0_59] : memref<4x576xf32, #tpu.memory_space<vmem>>, vector<4x576xf32>
    %93 = arith.addf %92, %91 : vector<4x576xf32>
    %c0_60 = arith.constant 0 : index
    %c0_61 = arith.constant 0 : index
    %94 = vector.load %arg6[%c0_60, %c0_61] : memref<4x576xf32, #tpu.memory_space<vmem>>, vector<4x576xf32>
    tpu.vector_store %arg6[%c0_60, %c0_61], %93 {strides = array<i32>} : memref<4x576xf32, #tpu.memory_space<vmem>>, vector<4x576xf32>,
    %c2_i32 = arith.constant 2 : i32
    %95 = arith.cmpi eq, %arg2, %c2_i32 : i32
    %96 = arith.extui %95 : i1 to i32
    %c0_i32_62 = arith.constant 0 : i32
    %97 = arith.cmpi ne, %96, %c0_i32_62 : i32
    scf.if %97 {
      %c0_63 = arith.constant 0 : index
      %c0_64 = arith.constant 0 : index
      %98 = vector.load %arg6[%c0_63, %c0_64] : memref<4x576xf32, #tpu.memory_space<vmem>>, vector<4x576xf32>
      %99 = vector.shape_cast %98 : vector<4x576xf32> to vector<1x1x4x576xf32>
      %c0_65 = arith.constant 0 : index
      %c0_66 = arith.constant 0 : index
      %c0_67 = arith.constant 0 : index
      %c0_68 = arith.constant 0 : index
      %100 = vector.load %arg5[%c0_65, %c0_66, %c0_67, %c0_68] : memref<1x1x4x576xf32, #tpu.memory_space<vmem>>, vector<1x1x4x576xf32>
      tpu.vector_store %arg5[%c0_65, %c0_66, %c0_67, %c0_68], %99 {strides = array<i32>} : memref<1x1x4x576xf32, #tpu.memory_space<vmem>>, vector<1x1x4x576xf32>,
    } else {
    }
    return
  }
  func.func @transform_0(%arg0: i32, %arg1: i32, %arg2: i32) -> (i32, i32, i32, i32) {
    %0 = arith.addi %arg1, %arg2 : i32
    %c0_i32 = arith.constant 0 : i32
    %c0_i32_0 = arith.constant 0 : i32
    %c0_i32_1 = arith.constant 0 : i32
    return %arg0, %0, %c0_i32, %c0_i32_0 : i32, i32, i32, i32
  }
  func.func @transform_1(%arg0: i32, %arg1: i32, %arg2: i32) -> (i32, i32, i32, i32) {
    %c0_i32 = arith.constant 0 : i32
    %c0_i32_0 = arith.constant 0 : i32
    %c0_i32_1 = arith.constant 0 : i32
    %c0_i32_2 = arith.constant 0 : i32
    return %arg2, %c0_i32, %c0_i32_0, %c0_i32_1 : i32, i32, i32, i32
  }
  func.func @transform_2(%arg0: i32, %arg1: i32, %arg2: i32) -> (i32, i32, i32, i32) {
    %c0_i32 = arith.constant 0 : i32
    %c0_i32_0 = arith.constant 0 : i32
    %c0_i32_1 = arith.constant 0 : i32
    return %arg0, %arg1, %c0_i32, %c0_i32_0 : i32, i32, i32, i32
  }
}

</mosaic_0001>

<llo_original>
// kernel: tpu_custom_call.1
$region0: #{tpu_custom_call.1}
  #allocation0 [shape = 'u32[]', space=smem, size = 0x4, offset = 0x4, fixed_abs, tag = 'smem constant byte address 0x4 - core index']
  #allocation1 [shape = 'u32[144,128]{1,0:T(1,128)}', space=vmem, size = 0x12000, scoped, tag = 'internal scratch']
  #allocation2 [shape = 'f32[4,576]{1,0:T(4,128)}', space=vmem, size = 0x2800, scoped, tag = 'scratch operand']
  %s0 = inlined_call_operand.vmem [shape: bf16[2,20,1,672], index: 0, kind: input, shape index: {}]
  %s1 = inlined_call_operand.vmem [shape: bf16[3,9,4,1], index: 1, kind: input, shape index: {}]
  %s2 = inlined_call_operand.hbm [shape: f32[2,18,4,576], index: 2, kind: output, shape index: {}]
  %s3 = sld [smem:[#allocation0]]
  $region49: #{tpu_custom_call.1} parent=0
    _
  %s5 = ssub.s32 1, %s3
  %s6 = scalar_select 0, %s5, %s3
  $region1: #{tpu_custom_call.1} parent=0
    #allocation3 [shape = 'u8[20480]{0}', space=vmem, size = 0x5000, scoped, tag = 'output window, operand 0']
    #allocation4 [shape = 's32[2]{0}', space=sflag, size = 0x8, scoped, tag = 'scoped memory for tpu_custom_call.1']
    %7 = vsyncpa [#allocation4], 0
    %s8 = scalar_lea.sflag [#allocation4], 1
    %9 = vsyncpa %s8, 0
    loop: start=0, step=1, limit=110
    $region2: #{tpu_custom_call.1} parent=1 // loop_pre_header
      _
    $region3: #{tpu_custom_call.1} parent=1 // loop_header
      %s11 = sphi 0, %s15
      %p12 = scmp.ge.s32.totalorder %s11, 110
      %s18 = sphi 0, %s37
      %s19 = sphi 0, %s33
      %s20 = sphi 0, %s29
      %s21 = sphi 0, %s18
      %s22 = sphi 0, %s19
      %s23 = sphi 0, %s20
      %s24 = sphi 0, %s21
      %s25 = sphi 0, %s22
      %s26 = sphi 0, %s23
      %s44 = sphi 0, %s46
      %s47 = sphi 0, %s44
      %s48 = sphi 0, %s47
      %s64 = sphi 0, %s48
      %s70 = sphi 0, %s72
      %s73 = sphi 0, %s70
      %s74 = sphi 0, %s73
      %s90 = sphi 0, %s74
      %s98 = sphi 0, %s100
      %s101 = sphi 0, %s98
      %s102 = sphi 0, %s101
      %s118 = sphi 0, %s102
    $region4: #{tpu_custom_call.1} parent=1 // loop_header_branch
      %14 = sbr.rel (%p12) target = $region8
    $region5: #{tpu_custom_call.1} parent=1 // loop_body
      %s16 = ssub.s32 %s11, 1
      %s17 = ssub.s32 %s11, 2
      %s27 = sadd.s32 1, %s20
      %p28 = scmp.ge.s32.totalorder %s27, 3
      %s29 = scalar_select %p28, 0, %s27
      %s30 = sadd.s32 1, %s19
      %s31 = scalar_select %p28, %s30, %s19
      %p32 = scmp.ge.s32.totalorder %s31, 18
      %s33 = scalar_select %p32, 0, %s31
      %s34 = sadd.s32 1, %s18
      %s35 = scalar_select %p32, %s34, %s18
      %p36 = scmp.ge.s32.totalorder %s35, 2
      %s37 = scalar_select %p36, 0, %s35
      %s38 = sadd.s32 %s19, %s20
      %s39 = sadd.s32 %s33, %s29
      %s40 = ssub.s32 %s18, %s37
      %s41 = ssub.s32 %s38, %s39
      %s42 = sor.u32 %s40, %s41
      %p43 = scmp.eq.s32.totalorder %s42, 0
      %s45 = sadd.s32 %s44, 1
      %s46 = scalar_select %p43, %s44, %s45
      %p49 = pneg %p43
      %p50 = scmp.eq.s32.totalorder %s11, 107
      %p51 = por %p49, %p50
      %p52 = scmp.ne.s32.totalorder %s44, %s47
      %p53 = scmp.eq.s32.totalorder %s11, 0
      %p54 = por %p52, %p53
      %p55 = scmp.ne.s32.totalorder %s44, %s47
      %p56 = scmp.eq.s32.totalorder %s16, 107
      %p57 = por %p55, %p56
      %p58 = scmp.ne.s32.totalorder %s47, %s48
      %p59 = scmp.eq.s32.totalorder %s16, 0
      %p60 = por %p58, %p59
      %p61 = scmp.ne.s32.totalorder %s47, %s48
      %p62 = scmp.eq.s32.totalorder %s17, 107
      %p63 = por %p61, %p62
      %p65 = scmp.ne.s32.totalorder %s48, %s64
      %p66 = scmp.eq.s32.totalorder %s17, 0
      %p67 = por %p65, %p66
      %s68 = ssub.s32 %s20, %s29
      %p69 = scmp.eq.s32.totalorder %s68, 0
      %s71 = sadd.s32 %s70, 1
      %s72 = scalar_select %p69, %s70, %s71
      %p75 = pneg %p69
      %p76 = scmp.eq.s32.totalorder %s11, 107
      %p77 = por %p75, %p76
      %p78 = scmp.ne.s32.totalorder %s70, %s73
      %p79 = scmp.eq.s32.totalorder %s11, 0
      %p80 = por %p78, %p79
      %p81 = scmp.ne.s32.totalorder %s70, %s73
      %p82 = scmp.eq.s32.totalorder %s16, 107
      %p83 = por %p81, %p82
      %p84 = scmp.ne.s32.totalorder %s73, %s74
      %p85 = scmp.eq.s32.totalorder %s16, 0
      %p86 = por %p84, %p85
      %p87 = scmp.ne.s32.totalorder %s73, %s74
      %p88 = scmp.eq.s32.totalorder %s17, 107
      %p89 = por %p87, %p88
      %p91 = scmp.ne.s32.totalorder %s74, %s90
      %p92 = scmp.eq.s32.totalorder %s17, 0
      %p93 = por %p91, %p92
      %s94 = ssub.s32 %s18, %s37
      %s95 = ssub.s32 %s19, %s33
      %s96 = sor.u32 %s94, %s95
      %p97 = scmp.eq.s32.totalorder %s96, 0
      %s99 = sadd.s32 %s98, 1
      %s100 = scalar_select %p97, %s98, %s99
      %p103 = pneg %p97
      %p104 = scmp.eq.s32.totalorder %s11, 107
      %p105 = por %p103, %p104
      %p106 = scmp.ne.s32.totalorder %s98, %s101
      %p107 = scmp.eq.s32.totalorder %s11, 0
      %p108 = por %p106, %p107
      %p109 = scmp.ne.s32.totalorder %s98, %s101
      %p110 = scmp.eq.s32.totalorder %s16, 107
      %p111 = por %p109, %p110
      %p112 = scmp.ne.s32.totalorder %s101, %s102
      %p113 = scmp.eq.s32.totalorder %s16, 0
      %p114 = por %p112, %p113
      %p115 = scmp.ne.s32.totalorder %s101, %s102
      %p116 = scmp.eq.s32.totalorder %s17, 107
      %p117 = por %p115, %p116
      %p119 = scmp.ne.s32.totalorder %s102, %s118
      %p120 = scmp.eq.s32.totalorder %s17, 0
      %p121 = por %p119, %p120
      %p122 = scmp.le.s32.totalorder 1, %s11
      %p123 = scmp.lt.s32.totalorder %s11, 109
      %p124 = pnand %p122, %p123
      %p125 = pneg %p124
      // Predicated region
      $region9: #{tpu_custom_call.1} parent=5 // pred_check
        _
      $region10: #{tpu_custom_call.1} parent=5 // pred_check_branch
        %127 = sbr.rel (%p124) target = $region12
      $region11: #{tpu_custom_call.1} parent=5 // pred_region
        %s128 = ssub.s32 %s11, 1
      $region12: #{tpu_custom_call.1} parent=5 // pred_fallthru
        _
      %p129 = scmp.lt.s32.totalorder %s11, 108
      // Predicated region
      $region13: #{tpu_custom_call.1} parent=5 // pred_check
        %p130 = pneg %p129
      $region14: #{tpu_custom_call.1} parent=5 // pred_check_branch
        %132 = sbr.rel (%p130) target = $region16
      $region15: #{tpu_custom_call.1} parent=5 // pred_region
        // Predicated region
        $region17: #{tpu_custom_call.1} parent=15 // pred_check
          %p133 = pneg %p54
        $region18: #{tpu_custom_call.1} parent=15 // pred_check_branch
          %135 = sbr.rel (%p133) target = $region20
        $region19: #{tpu_custom_call.1} parent=15 // pred_region
          %s136 = sadd.s32 %s19, %s20
          %p137 = scmp.lt.s32.totalorder %s18, 1
          %s138 = scalar_select %p137, %s18, 1
          %p139 = scmp.lt.s32.totalorder %s136, 19
          %s140 = scalar_select %p139, %s136, 19
          %s141 = smul.addr %s140, 6
          %s142 = smul.addr %s138, 120
          %s143 = sadd.s32 %s141, %s142
          %s144 = scalar_lea.vmem %s0, %s143
          %s145 = sadd.s32 %s19, %s20
        $region20: #{tpu_custom_call.1} parent=15 // pred_fallthru
          _
        // Predicated region
        $region21: #{tpu_custom_call.1} parent=15 // pred_check
          %p146 = pneg %p80
        $region22: #{tpu_custom_call.1} parent=15 // pred_check_branch
          %148 = sbr.rel (%p146) target = $region24
        $region23: #{tpu_custom_call.1} parent=15 // pred_region
          %p149 = scmp.lt.s32.totalorder %s20, 2
          %s150 = scalar_select %p149, %s20, 2
          %s151 = smul.addr %s150, 9
          %s152 = smul.addr %s151, 2
          %s153 = scalar_lea.vmem %s1, %s152
        $region24: #{tpu_custom_call.1} parent=15 // pred_fallthru
          _
      $region16: #{tpu_custom_call.1} parent=5 // pred_fallthru
        _
      %p154 = scmp.le.s32.totalorder 1, %s11
      %p155 = scmp.lt.s32.totalorder %s11, 109
      %p156 = pnand %p154, %p155
      %p157 = pneg %p156
      // Predicated region
      $region25: #{tpu_custom_call.1} parent=5 // pred_check
        _
      $region26: #{tpu_custom_call.1} parent=5 // pred_check_branch
        %159 = sbr.rel (%p156) target = $region28
      $region27: #{tpu_custom_call.1} parent=5 // pred_region
        %s160 = ssub.s32 %s11, 1
        %s161 = sadd.s32 %s22, %s23
        %p162 = scmp.lt.s32.totalorder %s21, 1
        %s163 = scalar_select %p162, %s21, 1
        %p164 = scmp.lt.s32.totalorder %s161, 19
        %s165 = scalar_select %p164, %s161, 19
        %s166 = smul.addr %s165, 6
        %s167 = smul.addr %s163, 120
        %s168 = sadd.s32 %s166, %s167
        %s169 = scalar_lea.vmem %s0, %s168
        %p170 = pneg %p60
        %p171 = pneg %p57
        %p172 = scmp.lt.s32.totalorder %s23, 2
        %s173 = scalar_select %p172, %s23, 2
        %s174 = smul.addr %s173, 9
        %s175 = smul.addr %s174, 2
        %s176 = scalar_lea.vmem %s1, %s175
        %p177 = pneg %p86
        %p178 = pneg %p83
        %p179 = pneg %p114
        %p180 = pneg %p111
        %s181 = sand.u32 %s101, 1
        %s182 = scalar_lea.sflag [#allocation4], %s181
        %s183 = sand.u32 %s101, 1
        %s184 = smul.addr %s183, 20
        %s185 = scalar_lea.vmem [#allocation3], %s184
        %s186 = sadd.s32 %s22, %s23
        %p187 = scmp.lt.s32.totalorder %s21, 1
        %s188 = scalar_select %p187, %s21, 1
        %p189 = scmp.lt.s32.totalorder %s186, 19
        %s190 = scalar_select %p189, %s186, 19
        %s191 = smul.addr %s190, 6
        %s192 = smul.addr %s188, 120
        %s193 = sadd.s32 %s191, %s192
        %s194 = scalar_lea.vmem %s0, %s193
        %s195 = sadd.s32 %s22, %s23
        %p196 = scmp.lt.s32.totalorder %s23, 2
        %s197 = scalar_select %p196, %s23, 2
        %s198 = smul.addr %s197, 9
        %s199 = smul.addr %s198, 2
        %s200 = scalar_lea.vmem %s1, %s199
        %p201 = scmp.eq.s32.totalorder %s23, 0
        // Predicated region
        $region29: #{tpu_custom_call.1} parent=27 // pred_check
          %p202 = pneg %p201
        $region30: #{tpu_custom_call.1} parent=27 // pred_check_branch
          %204 = sbr.rel (%p202) target = $region32
        $region31: #{tpu_custom_call.1} parent=27 // pred_region
          %205 = vst [vmem:[#allocation2] sm:$0xff] 0.0
          %206 = vst [vmem:[#allocation2 + $0x8] sm:$0xff] 0.0
          %vm207 = vcmask 519168
          %208 = vst.msk [vmem:[#allocation2 + $0x10] sm:$0xf] %vm207, 0.0
        $region32: #{tpu_custom_call.1} parent=27 // pred_fallthru
          _
        %v209 = vld [vmem:[%s194] sm:$0x1f]
        %v210 = vld [vmem:[%s200] sm:$0x3]
        %v211 = vunpack.c.l.bf16 %v210
        %v212 = vunpack.c.l.bf16 %v209
        %v213 = vunpack.c.h.bf16 %v209
        %215 = vset.pattern.permute.xlu0 0
        %216 = vperm.xlu0 %215, %v211
        %v217 = vpop.permute.xlu0 %216
        %v220 = vunpack.c.l.s4 839922192
        %v221 = vunpack.c.0.s8 %v220
        %v222 = vlaneseq
        %v223 = vshrl.u32 %v222, 7
        %v224 = vsub.s32 %v221, %v223
        %v225 = vrot.slane %v217, %v224
        %v228 = vlaneseq
        %v229 = vshrl.u32 %v228, 7
        %v230 = vsub.s32 0, %v229
        %v231 = vrot.slane %v212, %v230
        %v232 = vlaneseq
        %v233 = vshrl.u32 %v232, 7
        %v234 = vsub.s32 2, %v233
        %v235 = vrot.slane %v212, %v234
        %v236 = vlaneseq
        %v237 = vshrl.u32 %v236, 7
        %v238 = vsub.s32 4, %v237
        %v239 = vrot.slane %v212, %v238
        %v240 = vlaneseq
        %v241 = vshrl.u32 %v240, 7
        %v242 = vsub.s32 6, %v241
        %v243 = vrot.slane %v212, %v242
        %v244 = vlaneseq
        %v245 = vshrl.u32 %v244, 7
        %v246 = vsub.s32 0, %v245
        %v247 = vrot.slane %v213, %v246
        %v253 = vlaneseq
        %v254 = vshrl.u32 %v253, 7
        %v255 = vsub.s32 0, %v254
        %v256 = vrot.slane %v231, %v255
        %v257 = vlaneseq
        %v258 = vshrl.u32 %v257, 7
        %v259 = vsub.s32 0, %v258
        %v260 = vrot.slane %v235, %v259
        %v261 = vlaneseq
        %v262 = vshrl.u32 %v261, 7
        %v263 = vsub.s32 0, %v262
        %v264 = vrot.slane %v239, %v263
        %v265 = vlaneseq
        %v266 = vshrl.u32 %v265, 7
        %v267 = vsub.s32 0, %v266
        %v268 = vrot.slane %v243, %v267
        %v269 = vlaneseq
        %v270 = vshrl.u32 %v269, 7
        %v271 = vsub.s32 0, %v270
        %v272 = vrot.slane %v247, %v271
        %v277 = vcombine.low %v256, %v260
        %v278 = vcombine.low %v264, %v268
        %v281 = vmul.f32 %v225, %v277
        %v282 = vmul.f32 %v225, %v278
        %v283 = vmul.f32 %v225, %v272
        %v284 = vld [vmem:[%s194] sm:$0x1f]
        %s285 = scalar_lea.vmem %s200, 2
        %v286 = vld [vmem:[%s285] sm:$0x3]
        %v287 = vunpack.c.l.bf16 %v286
        %v288 = vunpack.c.l.bf16 %v284
        %v289 = vunpack.c.h.bf16 %v284
        %291 = vset.pattern.permute.xlu0 0
        %292 = vperm.xlu0 %291, %v287
        %v293 = vpop.permute.xlu0 %292
        %v296 = vunpack.c.l.s4 839922192
        %v297 = vunpack.c.0.s8 %v296
        %v298 = vlaneseq
        %v299 = vshrl.u32 %v298, 7
        %v300 = vsub.s32 %v297, %v299
        %v301 = vrot.slane %v293, %v300
        %v304 = vlaneseq
        %v305 = vshrl.u32 %v304, 7
        %v306 = vsub.s32 0, %v305
        %v307 = vrot.slane %v288, %v306
        %v308 = vlaneseq
        %v309 = vshrl.u32 %v308, 7
        %v310 = vsub.s32 2, %v309
        %v311 = vrot.slane %v288, %v310
        %v312 = vlaneseq
        %v313 = vshrl.u32 %v312, 7
        %v314 = vsub.s32 4, %v313
        %v315 = vrot.slane %v288, %v314
        %v316 = vlaneseq
        %v317 = vshrl.u32 %v316, 7
        %v318 = vsub.s32 6, %v317
        %v319 = vrot.slane %v288, %v318
        %v320 = vlaneseq
        %v321 = vshrl.u32 %v320, 7
        %v322 = vsub.s32 0, %v321
        %v323 = vrot.slane %v289, %v322
        %v329 = vlaneseq
        %v330 = vshrl.u32 %v329, 7
        %v331 = vsub.s32 0, %v330
        %v332 = vrot.slane %v307, %v331
        %v333 = vlaneseq
        %v334 = vshrl.u32 %v333, 7
        %v335 = vsub.s32 0, %v334
        %v336 = vrot.slane %v311, %v335
        %v337 = vlaneseq
        %v338 = vshrl.u32 %v337, 7
        %v339 = vsub.s32 0, %v338
        %v340 = vrot.slane %v315, %v339
        %v341 = vlaneseq
        %v342 = vshrl.u32 %v341, 7
        %v343 = vsub.s32 0, %v342
        %v344 = vrot.slane %v319, %v343
        %v345 = vlaneseq
        %v346 = vshrl.u32 %v345, 7
        %v347 = vsub.s32 0, %v346
        %v348 = vrot.slane %v323, %v347
        %v354 = vcombine.low %v332, %v336
        %v355 = vcombine.low %v340, %v344
        %356 = vrot.lane.b32.xlu0 %v354, 127
        %v357 = vpop.permute.xlu0 %356
        %358 = vrot.lane.b32.xlu0 %v355, 127
        %v359 = vpop.permute.xlu0 %358
        %360 = vrot.lane.b32.xlu0 %v348, 127
        %v361 = vpop.permute.xlu0 %360
        %v362 = vrot.slane %v357, 4
        %v363 = vrot.slane %v359, 4
        %v364 = vrot.slane %v361, 4
        %vm365 = vcmask 1043456
        %v366 = vsel %vm365, %v362, %v363
        %vm367 = vcmask 1039360
        %v368 = vsel %vm367, %v357, %v366
        %v369 = vsel %vm365, %v363, %v364
        %v370 = vsel %vm367, %v359, %v369
        %v374 = vmul.f32 %v301, %v368
        %v375 = vmul.f32 %v301, %v370
        %v376 = vmul.f32 %v301, %v361
        %v377 = vadd.f32 %v281, %v374
        %v378 = vadd.f32 %v282, %v375
        %v379 = vadd.f32 %v283, %v376
        %v380 = vld [vmem:[%s194] sm:$0x1f]
        %s381 = scalar_lea.vmem %s200, 4
        %v382 = vld [vmem:[%s381] sm:$0x3]
        %v383 = vunpack.c.l.bf16 %v382
        %v384 = vunpack.c.l.bf16 %v380
        %v385 = vunpack.c.h.bf16 %v380
        %387 = vset.pattern.permute.xlu0 0
        %388 = vperm.xlu0 %387, %v383
        %v389 = vpop.permute.xlu0 %388
        %v392 = vunpack.c.l.s4 839922192
        %v393 = vunpack.c.0.s8 %v392
        %v394 = vlaneseq
        %v395 = vshrl.u32 %v394, 7
        %v396 = vsub.s32 %v393, %v395
        %v397 = vrot.slane %v389, %v396
        %v400 = vlaneseq
        %v401 = vshrl.u32 %v400, 7
        %v402 = vsub.s32 0, %v401
        %v403 = vrot.slane %v384, %v402
        %v404 = vlaneseq
        %v405 = vshrl.u32 %v404, 7
        %v406 = vsub.s32 2, %v405
        %v407 = vrot.slane %v384, %v406
        %v408 = vlaneseq
        %v409 = vshrl.u32 %v408, 7
        %v410 = vsub.s32 4, %v409
        %v411 = vrot.slane %v384, %v410
        %v412 = vlaneseq
        %v413 = vshrl.u32 %v412, 7
        %v414 = vsub.s32 6, %v413
        %v415 = vrot.slane %v384, %v414
        %v416 = vlaneseq
        %v417 = vshrl.u32 %v416, 7
        %v418 = vsub.s32 0, %v417
        %v419 = vrot.slane %v385, %v418
        %v425 = vlaneseq
        %v426 = vshrl.u32 %v425, 7
        %v427 = vsub.s32 0, %v426
        %v428 = vrot.slane %v403, %v427
        %v429 = vlaneseq
        %v430 = vshrl.u32 %v429, 7
        %v431 = vsub.s32 0, %v430
        %v432 = vrot.slane %v407, %v431
        %v433 = vlaneseq
        %v434 = vshrl.u32 %v433, 7
        %v435 = vsub.s32 0, %v434
        %v436 = vrot.slane %v411, %v435
        %v437 = vlaneseq
        %v438 = vshrl.u32 %v437, 7
        %v439 = vsub.s32 0, %v438
        %v440 = vrot.slane %v415, %v439
        %v441 = vlaneseq
        %v442 = vshrl.u32 %v441, 7
        %v443 = vsub.s32 0, %v442
        %v444 = vrot.slane %v419, %v443
        %v450 = vcombine.low %v428, %v432
        %v451 = vcombine.low %v436, %v440
        %452 = vrot.lane.b32.xlu0 %v450, 126
        %v453 = vpop.permute.xlu0 %452
        %454 = vrot.lane.b32.xlu0 %v451, 126
        %v455 = vpop.permute.xlu0 %454
        %456 = vrot.lane.b32.xlu0 %v444, 126
        %v457 = vpop.permute.xlu0 %456
        %v458 = vrot.slane %v453, 4
        %v459 = vrot.slane %v455, 4
        %v460 = vrot.slane %v457, 4
        %v461 = vsel %vm365, %v458, %v459
        %vm462 = vcmask 1031168
        %v463 = vsel %vm462, %v453, %v461
        %v464 = vsel %vm365, %v459, %v460
        %v465 = vsel %vm462, %v455, %v464
        %v469 = vmul.f32 %v397, %v463
        %v470 = vmul.f32 %v397, %v465
        %v471 = vmul.f32 %v397, %v457
        %v472 = vadd.f32 %v377, %v469
        %v473 = vadd.f32 %v378, %v470
        %v474 = vadd.f32 %v379, %v471
        %v475 = vld [vmem:[%s194] sm:$0x1f]
        %s476 = scalar_lea.vmem %s200, 6
        %v477 = vld [vmem:[%s476] sm:$0x3]
        %v478 = vunpack.c.l.bf16 %v477
        %v479 = vunpack.c.l.bf16 %v475
        %v480 = vunpack.c.h.bf16 %v475
        %482 = vset.pattern.permute.xlu0 0
        %483 = vperm.xlu0 %482, %v478
        %v484 = vpop.permute.xlu0 %483
        %v487 = vunpack.c.l.s4 839922192
        %v488 = vunpack.c.0.s8 %v487
        %v489 = vlaneseq
        %v490 = vshrl.u32 %v489, 7
        %v491 = vsub.s32 %v488, %v490
        %v492 = vrot.slane %v484, %v491
        %v495 = vlaneseq
        %v496 = vshrl.u32 %v495, 7
        %v497 = vsub.s32 0, %v496
        %v498 = vrot.slane %v479, %v497
        %v499 = vlaneseq
        %v500 = vshrl.u32 %v499, 7
        %v501 = vsub.s32 2, %v500
        %v502 = vrot.slane %v479, %v501
        %v503 = vlaneseq
        %v504 = vshrl.u32 %v503, 7
        %v505 = vsub.s32 4, %v504
        %v506 = vrot.slane %v479, %v505
        %v507 = vlaneseq
        %v508 = vshrl.u32 %v507, 7
        %v509 = vsub.s32 6, %v508
        %v510 = vrot.slane %v479, %v509
        %v511 = vlaneseq
        %v512 = vshrl.u32 %v511, 7
        %v513 = vsub.s32 0, %v512
        %v514 = vrot.slane %v480, %v513
        %v520 = vlaneseq
        %v521 = vshrl.u32 %v520, 7
        %v522 = vsub.s32 0, %v521
        %v523 = vrot.slane %v498, %v522
        %v524 = vlaneseq
        %v525 = vshrl.u32 %v524, 7
        %v526 = vsub.s32 0, %v525
        %v527 = vrot.slane %v502, %v526
        %v528 = vlaneseq
        %v529 = vshrl.u32 %v528, 7
        %v530 = vsub.s32 0, %v529
        %v531 = vrot.slane %v506, %v530
        %v532 = vlaneseq
        %v533 = vshrl.u32 %v532, 7
        %v534 = vsub.s32 0, %v533
        %v535 = vrot.slane %v510, %v534
        %v536 = vlaneseq
        %v537 = vshrl.u32 %v536, 7
        %v538 = vsub.s32 0, %v537
        %v539 = vrot.slane %v514, %v538
        %v545 = vcombine.low %v523, %v527
        %v546 = vcombine.low %v531, %v535
        %547 = vrot.lane.b32.xlu0 %v545, 96
        %v548 = vpop.permute.xlu0 %547
        %549 = vrot.lane.b32.xlu0 %v546, 96
        %v550 = vpop.permute.xlu0 %549
        %551 = vrot.lane.b32.xlu0 %v539, 96
        %v552 = vpop.permute.xlu0 %551
        %v553 = vrot.slane %v548, 4
        %v554 = vrot.slane %v550, 4
        %v555 = vrot.slane %v552, 4
        %v556 = vsel %vm365, %v553, %v554
        %vm557 = vcmask 785408
        %v558 = vsel %vm557, %v548, %v556
        %v559 = vsel %vm365, %v554, %v555
        %v560 = vsel %vm557, %v550, %v559
        %v564 = vmul.f32 %v492, %v558
        %v565 = vmul.f32 %v492, %v560
        %v566 = vmul.f32 %v492, %v552
        %v567 = vadd.f32 %v472, %v564
        %v568 = vadd.f32 %v473, %v565
        %v569 = vadd.f32 %v474, %v566
        %v570 = vld [vmem:[%s194] sm:$0x1f]
        %s571 = scalar_lea.vmem %s200, 8
        %v572 = vld [vmem:[%s571] sm:$0x3]
        %v573 = vunpack.c.l.bf16 %v572
        %v574 = vunpack.c.l.bf16 %v570
        %v575 = vunpack.c.h.bf16 %v570
        %577 = vset.pattern.permute.xlu0 0
        %578 = vperm.xlu0 %577, %v573
        %v579 = vpop.permute.xlu0 %578
        %v582 = vunpack.c.l.s4 839922192
        %v583 = vunpack.c.0.s8 %v582
        %v584 = vlaneseq
        %v585 = vshrl.u32 %v584, 7
        %v586 = vsub.s32 %v583, %v585
        %v587 = vrot.slane %v579, %v586
        %v590 = vlaneseq
        %v591 = vshrl.u32 %v590, 7
        %v592 = vsub.s32 0, %v591
        %v593 = vrot.slane %v574, %v592
        %v594 = vlaneseq
        %v595 = vshrl.u32 %v594, 7
        %v596 = vsub.s32 2, %v595
        %v597 = vrot.slane %v574, %v596
        %v598 = vlaneseq
        %v599 = vshrl.u32 %v598, 7
        %v600 = vsub.s32 4, %v599
        %v601 = vrot.slane %v574, %v600
        %v602 = vlaneseq
        %v603 = vshrl.u32 %v602, 7
        %v604 = vsub.s32 6, %v603
        %v605 = vrot.slane %v574, %v604
        %v606 = vlaneseq
        %v607 = vshrl.u32 %v606, 7
        %v608 = vsub.s32 0, %v607
        %v609 = vrot.slane %v575, %v608
        %v615 = vlaneseq
        %v616 = vshrl.u32 %v615, 7
        %v617 = vsub.s32 0, %v616
        %v618 = vrot.slane %v593, %v617
        %v619 = vlaneseq
        %v620 = vshrl.u32 %v619, 7
        %v621 = vsub.s32 0, %v620
        %v622 = vrot.slane %v597, %v621
        %v623 = vlaneseq
        %v624 = vshrl.u32 %v623, 7
        %v625 = vsub.s32 0, %v624
        %v626 = vrot.slane %v601, %v625
        %v627 = vlaneseq
        %v628 = vshrl.u32 %v627, 7
        %v629 = vsub.s32 0, %v628
        %v630 = vrot.slane %v605, %v629
        %v631 = vlaneseq
        %v632 = vshrl.u32 %v631, 7
        %v633 = vsub.s32 0, %v632
        %v634 = vrot.slane %v609, %v633
        %v640 = vcombine.low %v618, %v622
        %v641 = vcombine.low %v626, %v630
        %642 = vrot.lane.b32.xlu0 %v640, 95
        %v643 = vpop.permute.xlu0 %642
        %644 = vrot.lane.b32.xlu0 %v641, 95
        %v645 = vpop.permute.xlu0 %644
        %646 = vrot.lane.b32.xlu0 %v634, 95
        %v647 = vpop.permute.xlu0 %646
        %v648 = vrot.slane %v643, 4
        %v649 = vrot.slane %v645, 4
        %v650 = vrot.slane %v647, 4
        %v651 = vsel %vm365, %v648, %v649
        %vm652 = vcmask 777216
        %v653 = vsel %vm652, %v643, %v651
        %v654 = vsel %vm365, %v649, %v650
        %v655 = vsel %vm652, %v645, %v654
        %v659 = vmul.f32 %v587, %v653
        %v660 = vmul.f32 %v587, %v655
        %v661 = vmul.f32 %v587, %v647
        %v662 = vadd.f32 %v567, %v659
        %v663 = vadd.f32 %v568, %v660
        %v664 = vadd.f32 %v569, %v661
        %v665 = vld [vmem:[%s194] sm:$0x1f]
        %s666 = scalar_lea.vmem %s200, 10
        %v667 = vld [vmem:[%s666] sm:$0x3]
        %v668 = vunpack.c.l.bf16 %v667
        %v669 = vunpack.c.l.bf16 %v665
        %v670 = vunpack.c.h.bf16 %v665
        %672 = vset.pattern.permute.xlu0 0
        %673 = vperm.xlu0 %672, %v668
        %v674 = vpop.permute.xlu0 %673
        %v677 = vunpack.c.l.s4 839922192
        %v678 = vunpack.c.0.s8 %v677
        %v679 = vlaneseq
        %v680 = vshrl.u32 %v679, 7
        %v681 = vsub.s32 %v678, %v680
        %v682 = vrot.slane %v674, %v681
        %v685 = vlaneseq
        %v686 = vshrl.u32 %v685, 7
        %v687 = vsub.s32 0, %v686
        %v688 = vrot.slane %v669, %v687
        %v689 = vlaneseq
        %v690 = vshrl.u32 %v689, 7
        %v691 = vsub.s32 2, %v690
        %v692 = vrot.slane %v669, %v691
        %v693 = vlaneseq
        %v694 = vshrl.u32 %v693, 7
        %v695 = vsub.s32 4, %v694
        %v696 = vrot.slane %v669, %v695
        %v697 = vlaneseq
        %v698 = vshrl.u32 %v697, 7
        %v699 = vsub.s32 6, %v698
        %v700 = vrot.slane %v669, %v699
        %v701 = vlaneseq
        %v702 = vshrl.u32 %v701, 7
        %v703 = vsub.s32 0, %v702
        %v704 = vrot.slane %v670, %v703
        %v710 = vlaneseq
        %v711 = vshrl.u32 %v710, 7
        %v712 = vsub.s32 0, %v711
        %v713 = vrot.slane %v688, %v712
        %v714 = vlaneseq
        %v715 = vshrl.u32 %v714, 7
        %v716 = vsub.s32 0, %v715
        %v717 = vrot.slane %v692, %v716
        %v718 = vlaneseq
        %v719 = vshrl.u32 %v718, 7
        %v720 = vsub.s32 0, %v719
        %v721 = vrot.slane %v696, %v720
        %v722 = vlaneseq
        %v723 = vshrl.u32 %v722, 7
        %v724 = vsub.s32 0, %v723
        %v725 = vrot.slane %v700, %v724
        %v726 = vlaneseq
        %v727 = vshrl.u32 %v726, 7
        %v728 = vsub.s32 0, %v727
        %v729 = vrot.slane %v704, %v728
        %v735 = vcombine.low %v713, %v717
        %v736 = vcombine.low %v721, %v725
        %737 = vrot.lane.b32.xlu0 %v735, 94
        %v738 = vpop.permute.xlu0 %737
        %739 = vrot.lane.b32.xlu0 %v736, 94
        %v740 = vpop.permute.xlu0 %739
        %741 = vrot.lane.b32.xlu0 %v729, 94
        %v742 = vpop.permute.xlu0 %741
        %v743 = vrot.slane %v738, 4
        %v744 = vrot.slane %v740, 4
        %v745 = vrot.slane %v742, 4
        %v746 = vsel %vm365, %v743, %v744
        %vm747 = vcmask 769024
        %v748 = vsel %vm747, %v738, %v746
        %v749 = vsel %vm365, %v744, %v745
        %v750 = vsel %vm747, %v740, %v749
        %v754 = vmul.f32 %v682, %v748
        %v755 = vmul.f32 %v682, %v750
        %v756 = vmul.f32 %v682, %v742
        %v757 = vadd.f32 %v662, %v754
        %v758 = vadd.f32 %v663, %v755
        %v759 = vadd.f32 %v664, %v756
        %v760 = vld [vmem:[%s194] sm:$0x1f]
        %s761 = scalar_lea.vmem %s200, 12
        %v762 = vld [vmem:[%s761] sm:$0x3]
        %v763 = vunpack.c.l.bf16 %v762
        %v764 = vunpack.c.l.bf16 %v760
        %v765 = vunpack.c.h.bf16 %v760
        %767 = vset.pattern.permute.xlu0 0
        %768 = vperm.xlu0 %767, %v763
        %v769 = vpop.permute.xlu0 %768
        %v772 = vunpack.c.l.s4 839922192
        %v773 = vunpack.c.0.s8 %v772
        %v774 = vlaneseq
        %v775 = vshrl.u32 %v774, 7
        %v776 = vsub.s32 %v773, %v775
        %v777 = vrot.slane %v769, %v776
        %v780 = vlaneseq
        %v781 = vshrl.u32 %v780, 7
        %v782 = vsub.s32 0, %v781
        %v783 = vrot.slane %v764, %v782
        %v784 = vlaneseq
        %v785 = vshrl.u32 %v784, 7
        %v786 = vsub.s32 2, %v785
        %v787 = vrot.slane %v764, %v786
        %v788 = vlaneseq
        %v789 = vshrl.u32 %v788, 7
        %v790 = vsub.s32 4, %v789
        %v791 = vrot.slane %v764, %v790
        %v792 = vlaneseq
        %v793 = vshrl.u32 %v792, 7
        %v794 = vsub.s32 6, %v793
        %v795 = vrot.slane %v764, %v794
        %v796 = vlaneseq
        %v797 = vshrl.u32 %v796, 7
        %v798 = vsub.s32 0, %v797
        %v799 = vrot.slane %v765, %v798
        %v805 = vlaneseq
        %v806 = vshrl.u32 %v805, 7
        %v807 = vsub.s32 0, %v806
        %v808 = vrot.slane %v783, %v807
        %v809 = vlaneseq
        %v810 = vshrl.u32 %v809, 7
        %v811 = vsub.s32 0, %v810
        %v812 = vrot.slane %v787, %v811
        %v813 = vlaneseq
        %v814 = vshrl.u32 %v813, 7
        %v815 = vsub.s32 0, %v814
        %v816 = vrot.slane %v791, %v815
        %v817 = vlaneseq
        %v818 = vshrl.u32 %v817, 7
        %v819 = vsub.s32 0, %v818
        %v820 = vrot.slane %v795, %v819
        %v821 = vlaneseq
        %v822 = vshrl.u32 %v821, 7
        %v823 = vsub.s32 0, %v822
        %v824 = vrot.slane %v799, %v823
        %v830 = vcombine.low %v808, %v812
        %v831 = vcombine.low %v816, %v820
        %832 = vrot.lane.b32.xlu0 %v830, 64
        %v833 = vpop.permute.xlu0 %832
        %834 = vrot.lane.b32.xlu0 %v831, 64
        %v835 = vpop.permute.xlu0 %834
        %836 = vrot.lane.b32.xlu0 %v824, 64
        %v837 = vpop.permute.xlu0 %836
        %v838 = vrot.slane %v833, 4
        %v839 = vrot.slane %v835, 4
        %v840 = vrot.slane %v837, 4
        %v841 = vsel %vm365, %v838, %v839
        %vm842 = vcmask 523264
        %v843 = vsel %vm842, %v833, %v841
        %v844 = vsel %vm365, %v839, %v840
        %v845 = vsel %vm842, %v835, %v844
        %v849 = vmul.f32 %v777, %v843
        %v850 = vmul.f32 %v777, %v845
        %v851 = vmul.f32 %v777, %v837
        %v852 = vadd.f32 %v757, %v849
        %v853 = vadd.f32 %v758, %v850
        %v854 = vadd.f32 %v759, %v851
        %v855 = vld [vmem:[%s194] sm:$0x3f]
        %s856 = scalar_lea.vmem %s200, 14
        %v857 = vld [vmem:[%s856] sm:$0x3]
        %v858 = vunpack.c.l.bf16 %v857
        %v859 = vunpack.c.l.bf16 %v855
        %v860 = vunpack.c.h.bf16 %v855
        %862 = vset.pattern.permute.xlu0 0
        %863 = vperm.xlu0 %862, %v858
        %v864 = vpop.permute.xlu0 %863
        %v867 = vunpack.c.l.s4 839922192
        %v868 = vunpack.c.0.s8 %v867
        %v869 = vlaneseq
        %v870 = vshrl.u32 %v869, 7
        %v871 = vsub.s32 %v868, %v870
        %v872 = vrot.slane %v864, %v871
        %v875 = vlaneseq
        %v876 = vshrl.u32 %v875, 7
        %v877 = vsub.s32 0, %v876
        %v878 = vrot.slane %v859, %v877
        %v879 = vlaneseq
        %v880 = vshrl.u32 %v879, 7
        %v881 = vsub.s32 2, %v880
        %v882 = vrot.slane %v859, %v881
        %v883 = vlaneseq
        %v884 = vshrl.u32 %v883, 7
        %v885 = vsub.s32 4, %v884
        %v886 = vrot.slane %v859, %v885
        %v887 = vlaneseq
        %v888 = vshrl.u32 %v887, 7
        %v889 = vsub.s32 6, %v888
        %v890 = vrot.slane %v859, %v889
        %v891 = vlaneseq
        %v892 = vshrl.u32 %v891, 7
        %v893 = vsub.s32 0, %v892
        %v894 = vrot.slane %v860, %v893
        %v895 = vlaneseq
        %v896 = vshrl.u32 %v895, 7
        %v897 = vsub.s32 2, %v896
        %v898 = vrot.slane %v860, %v897
        %v905 = vlaneseq
        %v906 = vshrl.u32 %v905, 7
        %v907 = vsub.s32 0, %v906
        %v908 = vrot.slane %v878, %v907
        %v909 = vlaneseq
        %v910 = vshrl.u32 %v909, 7
        %v911 = vsub.s32 0, %v910
        %v912 = vrot.slane %v882, %v911
        %v913 = vlaneseq
        %v914 = vshrl.u32 %v913, 7
        %v915 = vsub.s32 0, %v914
        %v916 = vrot.slane %v886, %v915
        %v917 = vlaneseq
        %v918 = vshrl.u32 %v917, 7
        %v919 = vsub.s32 0, %v918
        %v920 = vrot.slane %v890, %v919
        %v921 = vlaneseq
        %v922 = vshrl.u32 %v921, 7
        %v923 = vsub.s32 0, %v922
        %v924 = vrot.slane %v894, %v923
        %v925 = vlaneseq
        %v926 = vshrl.u32 %v925, 7
        %v927 = vsub.s32 0, %v926
        %v928 = vrot.slane %v898, %v927
        %v935 = vcombine.low %v908, %v912
        %v936 = vcombine.low %v916, %v920
        %v937 = vcombine.low %v924, %v928
        %938 = vrot.lane.b32.xlu0 %v935, 63
        %v939 = vpop.permute.xlu0 %938
        %940 = vrot.lane.b32.xlu0 %v936, 63
        %v941 = vpop.permute.xlu0 %940
        %942 = vrot.lane.b32.xlu0 %v937, 63
        %v943 = vpop.permute.xlu0 %942
        %v944 = vrot.slane %v939, 4
        %v945 = vrot.slane %v941, 4
        %v946 = vrot.slane %v943, 4
        %v947 = vsel %vm365, %v944, %v945
        %vm948 = vcmask 515072
        %v949 = vsel %vm948, %v939, %v947
        %v950 = vsel %vm365, %v945, %v946
        %v951 = vsel %vm948, %v941, %v950
        %v952 = vsel %vm948, %v943, %v946
        %v956 = vmul.f32 %v872, %v949
        %v957 = vmul.f32 %v872, %v951
        %v958 = vmul.f32 %v872, %v952
        %v959 = vadd.f32 %v852, %v956
        %v960 = vadd.f32 %v853, %v957
        %v961 = vadd.f32 %v854, %v958
        %v962 = vld [vmem:[%s194] sm:$0x3f]
        %s963 = scalar_lea.vmem %s200, 16
        %v964 = vld [vmem:[%s963] sm:$0x3]
        %v965 = vunpack.c.l.bf16 %v964
        %v966 = vunpack.c.l.bf16 %v962
        %v967 = vunpack.c.h.bf16 %v962
        %969 = vset.pattern.permute.xlu0 0
        %970 = vperm.xlu0 %969, %v965
        %v971 = vpop.permute.xlu0 %970
        %v974 = vunpack.c.l.s4 839922192
        %v975 = vunpack.c.0.s8 %v974
        %v976 = vlaneseq
        %v977 = vshrl.u32 %v976, 7
        %v978 = vsub.s32 %v975, %v977
        %v979 = vrot.slane %v971, %v978
        %v982 = vlaneseq
        %v983 = vshrl.u32 %v982, 7
        %v984 = vsub.s32 0, %v983
        %v985 = vrot.slane %v966, %v984
        %v986 = vlaneseq
        %v987 = vshrl.u32 %v986, 7
        %v988 = vsub.s32 2, %v987
        %v989 = vrot.slane %v966, %v988
        %v990 = vlaneseq
        %v991 = vshrl.u32 %v990, 7
        %v992 = vsub.s32 4, %v991
        %v993 = vrot.slane %v966, %v992
        %v994 = vlaneseq
        %v995 = vshrl.u32 %v994, 7
        %v996 = vsub.s32 6, %v995
        %v997 = vrot.slane %v966, %v996
        %v998 = vlaneseq
        %v999 = vshrl.u32 %v998, 7
        %v1000 = vsub.s32 0, %v999
        %v1001 = vrot.slane %v967, %v1000
        %v1002 = vlaneseq
        %v1003 = vshrl.u32 %v1002, 7
        %v1004 = vsub.s32 2, %v1003
        %v1005 = vrot.slane %v967, %v1004
        %v1012 = vlaneseq
        %v1013 = vshrl.u32 %v1012, 7
        %v1014 = vsub.s32 0, %v1013
        %v1015 = vrot.slane %v985, %v1014
        %v1016 = vlaneseq
        %v1017 = vshrl.u32 %v1016, 7
        %v1018 = vsub.s32 0, %v1017
        %v1019 = vrot.slane %v989, %v1018
        %v1020 = vlaneseq
        %v1021 = vshrl.u32 %v1020, 7
        %v1022 = vsub.s32 0, %v1021
        %v1023 = vrot.slane %v993, %v1022
        %v1024 = vlaneseq
        %v1025 = vshrl.u32 %v1024, 7
        %v1026 = vsub.s32 0, %v1025
        %v1027 = vrot.slane %v997, %v1026
        %v1028 = vlaneseq
        %v1029 = vshrl.u32 %v1028, 7
        %v1030 = vsub.s32 0, %v1029
        %v1031 = vrot.slane %v1001, %v1030
        %v1032 = vlaneseq
        %v1033 = vshrl.u32 %v1032, 7
        %v1034 = vsub.s32 0, %v1033
        %v1035 = vrot.slane %v1005, %v1034
        %v1042 = vcombine.low %v1015, %v1019
        %v1043 = vcombine.low %v1023, %v1027
        %v1044 = vcombine.low %v1031, %v1035
        %1045 = vrot.lane.b32.xlu0 %v1042, 62
        %v1046 = vpop.permute.xlu0 %1045
        %1047 = vrot.lane.b32.xlu0 %v1043, 62
        %v1048 = vpop.permute.xlu0 %1047
        %1049 = vrot.lane.b32.xlu0 %v1044, 62
        %v1050 = vpop.permute.xlu0 %1049
        %v1051 = vrot.slane %v1046, 4
        %v1052 = vrot.slane %v1048, 4
        %v1053 = vrot.slane %v1050, 4
        %v1054 = vsel %vm365, %v1051, %v1052
        %vm1055 = vcmask 506880
        %v1056 = vsel %vm1055, %v1046, %v1054
        %v1057 = vsel %vm365, %v1052, %v1053
        %v1058 = vsel %vm1055, %v1048, %v1057
        %v1059 = vsel %vm1055, %v1050, %v1053
        %v1063 = vmul.f32 %v979, %v1056
        %v1064 = vmul.f32 %v979, %v1058
        %v1065 = vmul.f32 %v979, %v1059
        %v1066 = vadd.f32 %v959, %v1063
        %v1067 = vadd.f32 %v960, %v1064
        %v1068 = vadd.f32 %v961, %v1065
        %v1069 = vld [vmem:[#allocation2] sm:$0xff]
        %v1070 = vld [vmem:[#allocation2 + $0x8] sm:$0xff]
        %v1071 = vld [vmem:[#allocation2 + $0x10] sm:$0xf]
        %v1072 = vadd.f32 %v1069, %v1066
        %v1073 = vadd.f32 %v1070, %v1067
        %v1074 = vadd.f32 %v1071, %v1068
        %1075 = vst [vmem:[#allocation2] sm:$0xff] %v1072
        %1076 = vst [vmem:[#allocation2 + $0x8] sm:$0xff] %v1073
        %vm1077 = vcmask 519168
        %1078 = vst.msk [vmem:[#allocation2 + $0x10] sm:$0xf] %vm1077, %v1074
        %p1079 = scmp.eq.s32.totalorder %s23, 2
        // Predicated region
        $region33: #{tpu_custom_call.1} parent=27 // pred_check
          %p1080 = pneg %p1079
        $region34: #{tpu_custom_call.1} parent=27 // pred_check_branch
          %1082 = sbr.rel (%p1080) target = $region36
        $region35: #{tpu_custom_call.1} parent=27 // pred_region
          %v1083 = vld [vmem:[#allocation2] sm:$0xff]
          %v1084 = vld [vmem:[#allocation2 + $0x8] sm:$0xff]
          %v1085 = vld [vmem:[#allocation2 + $0x10] sm:$0xf]
          %1086 = vst [vmem:[%s185] sm:$0xff] %v1083
          %1087 = vst [vmem:[%s185 + $0x8] sm:$0xff] %v1084
          %1088 = vst.msk [vmem:[%s185 + $0x10] sm:$0xf] %vm1077, %v1085
        $region36: #{tpu_custom_call.1} parent=27 // pred_fallthru
          _
        %s1089 = sand.u32 %s101, 1
        %s1090 = scalar_lea.sflag [#allocation4], %s1089
        %s1091 = sand.u32 %s101, 1
        %s1092 = smul.addr %s1091, 20
        %s1093 = scalar_lea.vmem [#allocation3], %s1092
        // Predicated region
        $region37: #{tpu_custom_call.1} parent=27 // pred_check
          %p1094 = pneg %p111
        $region38: #{tpu_custom_call.1} parent=27 // pred_check_branch
          %1096 = sbr.rel (%p1094) target = $region40
        $region39: #{tpu_custom_call.1} parent=27 // pred_region
          %s1098 = ssub.s32 320, 320
          %1099 = vsyncadd %s1090, %s1098
          %s1100 = smul.addr %s22, 5
          %s1101 = smul.addr %s21, 90
          %s1102 = sadd.s32 %s1100, %s1101
          %s1103 = smul.addr %s1102, 64
          %s1104 = scalar_lea.hbm %s2, %s1103
          %s1106 = sshll.u32 %s1093, 4
          %s1107 = int_to_ptr.vmem [resolvable:$true] %s1106
          %1109 = dma.vmem_to_hbm [thread:$0]  %s1107, 320, %s1104, %s1090
        $region40: #{tpu_custom_call.1} parent=27 // pred_fallthru
          _
      $region28: #{tpu_custom_call.1} parent=5 // pred_fallthru
        _
      %p1110 = scmp.le.s32.totalorder 2, %s11
      // Predicated region
      $region41: #{tpu_custom_call.1} parent=5 // pred_check
        %p1111 = pneg %p1110
      $region42: #{tpu_custom_call.1} parent=5 // pred_check_branch
        %1113 = sbr.rel (%p1111) target = $region44
      $region43: #{tpu_custom_call.1} parent=5 // pred_region
        %s1114 = ssub.s32 %s11, 2
        // Predicated region
        $region45: #{tpu_custom_call.1} parent=43 // pred_check
          %p1115 = pneg %p117
        $region46: #{tpu_custom_call.1} parent=43 // pred_check_branch
          %1117 = sbr.rel (%p1115) target = $region48
        $region47: #{tpu_custom_call.1} parent=43 // pred_region
          %s1118 = sand.u32 %s102, 1
          %s1119 = scalar_lea.sflag [#allocation4], %s1118
          %s1120 = sand.u32 %s102, 1
          %s1121 = smul.addr %s1120, 20
          %s1122 = scalar_lea.vmem [#allocation3], %s1121
          %1123 = dma.done %s1119, 320
        $region48: #{tpu_custom_call.1} parent=43 // pred_fallthru
          _
      $region44: #{tpu_custom_call.1} parent=5 // pred_fallthru
        _
    $region6: #{tpu_custom_call.1} parent=1 // loop_footer
      %s15 = sadd.s32 1, %s11
    $region7: #{tpu_custom_call.1} parent=1 // loop_footer_branch
      %10 = sbr.rel target = $region3
    $region8: #{tpu_custom_call.1} parent=1 // loop_exit
      _
    %1124 = vsyncpa [#allocation4], 1
    %s1125 = scalar_lea.sflag [#allocation4], 1
    %1126 = vsyncpa %s1125, 1

</llo_original>
